<compile_context>
chip_gen: v7x
topology: tpu7x:2x2x1
jax: 0.10.0
libtpu: 0.0.40
codegen_flags: <defaults>
</compile_context>

<pallas_src>
import functools

import jax
import jax.numpy as jnp
import numpy as np
from jax import lax
from jax.experimental import pallas as pl
from jax.experimental.pallas import tpu as pltpu


def _round_up(x, m):
    return ((x + m - 1) // m) * m


# ----------------------------------------------------------------------------
# Pallas kernel
# ----------------------------------------------------------------------------
def _ddg_kernel(h_wt_ref, h_mt_ref, w1_ref, w2_ref, aux_ref,
                out_ref,
                max_wt_ref, max_mt_ref,
                *, bb, dim, fold, tl, rows_last):
    """Grid = (B-blocks [parallel], L-steps [arbitrary / reduction])."""
    dw = dim * fold
    l = pl.program_id(1)
    n_l = pl.num_programs(1)

    @pl.when(l == 0)
    def _init():
        max_wt_ref[...] = jnp.full_like(max_wt_ref, -jnp.inf)
        max_mt_ref[...] = jnp.full_like(max_mt_ref, -jnp.inf)

    def accumulate(rows):
        # (bb, tl, Dw) tile -> (bb, 8, Dw) running max.  The per-step reduce is a pure
        # element-wise VPU max over aligned 8-sublane slabs; the cross-sublane XLU
        # reduce is deferred to finalize.  `rows` is static: only the (partial) last
        # tile pays the iota+select mask (OOB rows of a partial block are undefined
        # and must be forced to -inf before the max).
        def one(h_ref, acc_ref):
            x = h_ref[...].astype(jnp.float32)
            if rows < tl:
                ridx = lax.broadcasted_iota(jnp.int32, x.shape, 1)
                x = jnp.where(ridx < rows, x, -jnp.inf)
            x = jnp.max(x.reshape(bb, tl // 8, 8, dw), axis=1)
            acc_ref[...] = jnp.maximum(acc_ref[...], x)

        one(h_wt_ref, max_wt_ref)
        one(h_mt_ref, max_mt_ref)

    if rows_last == tl:                       # L divides evenly: no masking anywhere
        accumulate(tl)
    else:
        @pl.when(l < n_l - 1)
        def _full_tiles():
            accumulate(tl)

        @pl.when(l == n_l - 1)
        def _tail_tile():
            accumulate(rows_last)

    @pl.when(l == n_l - 1)
    def _finalize():
        def collapse(acc):
            m = jnp.max(acc, axis=1)                      # (bb, Dw): one XLU reduce
            if fold > 1:                                  # unfold lane-packed groups
                shift = (fold * dim) // 2
                while shift >= dim:
                    m = jnp.maximum(m, pltpu.roll(m, shift=shift, axis=1))
                    shift //= 2
            return m[:, :dim]

        H_wt = collapse(max_wt_ref[...])                  # (bb, D)
        H_mt = collapse(max_mt_ref[...])                  # (bb, D)
        d = H_mt - H_wt

        # Fused readout: both (H_mt - H_wt) and (H_wt - H_mt) in one matmul chain.
        x = jnp.concatenate([d, -d], axis=0)              # (2*bb, D)
        b1 = aux_ref[0:1, :]
        b2 = aux_ref[1:2, :]
        w3 = aux_ref[2:3, :]
        b3 = aux_ref[3:4, 0:1]
        y = jnp.maximum(
            jnp.dot(x, w1_ref[...], preferred_element_type=jnp.float32) + b1 + x, 0.0)
        y = jnp.maximum(
            jnp.dot(y, w2_ref[...], preferred_element_type=jnp.float32) + b2 + y, 0.0)
        # Final Linear(D, 1) as a lane reduction (avoid a 1-column MXU matmul).
        pred = jnp.sum(y * w3, axis=-1, keepdims=True) + b3        # (2*bb, 1)

        # Lane-dense packed output block: rows [0, bb) preds, [bb, 2*bb) inverse preds.
        n_rows, n_lanes = out_ref.shape
        packed = jnp.broadcast_to(pred, (2 * bb, n_lanes))
        if n_rows > 2 * bb:
            packed = jnp.concatenate(
                [packed, jnp.zeros((n_rows - 2 * bb, n_lanes), jnp.float32)], axis=0)
        out_ref[...] = packed


# ----------------------------------------------------------------------------
# Wrapper
# ----------------------------------------------------------------------------
def ddg_forward(h_wt, h_mt, params, ddg_true, *, max_rows=1024,
                vmem_budget_bytes=40 * 1024 * 1024, stream_dtype=None):
    """h_wt, h_mt: (B, L, D).  ddg_true: (B,).  Returns (loss, ddg_pred, ddg_pred_inv)."""
    B, L, D = h_wt.shape
    w1, b1, w2, b2, w3, b3 = params
    ddg_true = jnp.asarray(ddg_true, jnp.float32)

    # --- lane folding: pack `fold` consecutive sequence positions per 128-lane row ---
    fold = 128 // D if (D <= 128 and 128 % D == 0) else 1
    if L % fold != 0:
        fold = 1
    assert fold & (fold - 1) == 0, "fold must be a power of two (roll-tree unfold)"
    Lf, Dw = L // fold, D * fold
    h_wt_f = h_wt.reshape(B, Lf, Dw)
    h_mt_f = h_mt.reshape(B, Lf, Dw)
    if stream_dtype is not None:
        # Optional bf16 streaming halves HBM bytes; max-pool is order-preserving and the
        # accumulators / readout stay f32.
        # TODO(synk): gate behind an accuracy check before enabling in training.
        h_wt_f = h_wt_f.astype(stream_dtype)
        h_mt_f = h_mt_f.astype(stream_dtype)
    itemsize = jnp.dtype(h_wt_f.dtype).itemsize

    # --- B-blocking (parallel axis -> both v7x TensorCores) + VMEM-budgeted L tile ---
    weight_bytes = 2 * 2 * D * D * 4 + 2 * 8 * D * 4        # w1, w2 (dbl-buffered) + aux
    stream_budget = max(vmem_budget_bytes - weight_bytes - (2 << 20), 1 << 20)
    lf_pad = _round_up(Lf, 8)
    max_rows = max(8, _round_up(max_rows, 8))

    def tl_for(bb_, n_buf):
        cap = stream_budget // (2 * n_buf * bb_ * Dw * itemsize)
        cap = max(8, (cap // 8) * 8)
        return max(8, min(lf_pad, max_rows, cap))

    bb = pl.cdiv(B, 2) if B >= 2 else 1          # >=2 B-blocks: feeds both v7x cores
    while bb > 1 and tl_for(bb, 2) < min(512, lf_pad):
        bb = pl.cdiv(bb, 2)                      # more B-blocks so the L tile stays large
    nb = pl.cdiv(B, bb)

    tl = tl_for(bb, 2)
    nl = pl.cdiv(Lf, tl)
    rows_last = Lf - (nl - 1) * tl               # static rows valid in the last tile
    tile_bytes = bb * tl * Dw * itemsize
    deep = (tile_bytes <= (256 << 10)) and (nl >= 4)   # 3rd buffer hides DMA latency
    n_buf = 3 if deep else 2

    # --- pack the tiny readout operands into a single lane-dense (8, D) block ---
    aux = jnp.zeros((8, D), jnp.float32)
    aux = aux.at[0, :].set(jnp.asarray(b1, jnp.float32).reshape(D))
    aux = aux.at[1, :].set(jnp.asarray(b2, jnp.float32).reshape(D))
    aux = aux.at[2, :].set(jnp.asarray(w3, jnp.float32).reshape(D))
    aux = aux.at[3, 0].set(jnp.asarray(b3, jnp.float32).reshape(()))

    R = _round_up(2 * bb, 8)
    kernel = functools.partial(_ddg_kernel, bb=bb, dim=D, fold=fold, tl=tl,
                               rows_last=rows_last)
    const = lambda b, l: (0, 0)

    flops = 2 * B * L * D + 2 * (2 * B) * D * D * 2
    bytes_accessed = (2 * B * L * D * itemsize + 2 * D * D * 4 + 8 * D * 4
                      + nb * R * 128 * 4)
    vmem_need = (2 * n_buf * tile_bytes + weight_bytes + 2 * R * 128 * 4
                 + 2 * bb * 8 * Dw * 4)
    vmem_limit = int(max(16 << 20, min(vmem_need + (4 << 20), 48 << 20)))

    def build(use_deep):
        if use_deep:
            h_spec = pl.BlockSpec((bb, tl, Dw), lambda b, l: (b, l, 0),
                                  pipeline_mode=pl.Buffered(3))
        else:
            h_spec = pl.BlockSpec((bb, tl, Dw), lambda b, l: (b, l, 0))
        return pl.pallas_call(
            kernel,
            out_shape=jax.ShapeDtypeStruct((nb, R, 128), jnp.float32),
            grid_spec=pltpu.PrefetchScalarGridSpec(
                num_scalar_prefetch=0,
                grid=(nb, nl),
                in_specs=[h_spec, h_spec,
                          pl.BlockSpec((D, D), const),
                          pl.BlockSpec((D, D), const),
                          pl.BlockSpec((8, D), const)],
                out_specs=pl.BlockSpec((None, R, 128), lambda b, l: (b, 0, 0)),
                scratch_shapes=[pltpu.VMEM((bb, 8, Dw), jnp.float32),
                                pltpu.VMEM((bb, 8, Dw), jnp.float32)]),
            compiler_params=pltpu.CompilerParams(
                dimension_semantics=("parallel", "arbitrary"),
                vmem_limit_bytes=vmem_limit),
            cost_estimate=pl.CostEstimate(flops=flops, transcendentals=0,
                                          bytes_accessed=bytes_accessed),
        )

    args = (h_wt_f, h_mt_f, jnp.asarray(w1, jnp.float32),
            jnp.asarray(w2, jnp.float32), aux)
    try:
        out = build(deep)(*args)
    except Exception:
        if not deep:
            raise
        out = build(False)(*args)     # deeper pipelining unavailable -> default 2 buffers

    col = out[:, :, 0]                                    # (nb, R)
    ddg_pred = col[:, 0:bb].reshape(nb * bb)[:B]
    ddg_pred_inv = col[:, bb:2 * bb].reshape(nb * bb)[:B]
    loss = 0.5 * (jnp.mean((ddg_pred - ddg_true) ** 2)
                  + jnp.mean((ddg_pred_inv + ddg_true) ** 2))
    return loss, ddg_pred, ddg_pred_inv


# ----------------------------------------------------------------------------
# Deterministic parameter init (mimics nn.Linear default uniform init)
# ----------------------------------------------------------------------------
def init_readout_params(key, dim):
    def linear(key, fan_in, fan_out):
        kw, kb = jax.random.split(key)
        bound = 1.0 / np.sqrt(fan_in)
        w = jax.random.uniform(kw, (fan_in, fan_out), jnp.float32, -bound, bound)
        b = jax.random.uniform(kb, (1, fan_out), jnp.float32, -bound, bound)
        return w, b

    k1, k2, k3 = jax.random.split(key, 3)
    w1, b1 = linear(k1, dim, dim)   # ResidualBlock 1
    w2, b2 = linear(k2, dim, dim)   # ResidualBlock 2
    w3, b3 = linear(k3, dim, 1)     # final Linear(dim, 1)
    return (w1, b1, w2, b2, w3, b3)


# ----------------------------------------------------------------------------
# Pure-JAX reference for verification
# ----------------------------------------------------------------------------
def ddg_forward_ref(h_wt, h_mt, params, ddg_true):
    w1, b1, w2, b2, w3, b3 = params
    H_wt = jnp.max(h_wt, axis=1)
    H_mt = jnp.max(h_mt, axis=1)

    def readout(x):
        y = jax.nn.relu(x @ w1 + b1 + x)
        y = jax.nn.relu(y @ w2 + b2 + y)
        return (y @ w3 + b3)[:, 0]

    d = H_mt - H_wt
    p, pi = readout(d), readout(-d)
    loss = (jnp.mean((p - ddg_true) ** 2) + jnp.mean((pi + ddg_true) ** 2)) / 2
    return loss, p, pi


if __name__ == "__main__":
    # batch, sequence length, node_feat_dim.
    # D=32 exercises the lane-fold path (fold=4 -> Lf=34, Dw=128); B=2 gives two parallel
    # B-blocks; max_rows=8 below forces a 5-step L pipeline with a ragged (2-row) tail.
    B, L, D = 2, 136, 32

    key = jax.random.PRNGKey(0)
    k_hw, k_hm, k_ddg, k_par = jax.random.split(key, 4)

    # Stand-ins for the (frozen, checkpoint-loaded) encoder stack outputs.
    h_wt = jax.random.normal(k_hw, (B, L, D), jnp.float32)
    h_mt = jax.random.normal(k_hm, (B, L, D), jnp.float32)
    ddg_true = jax.random.normal(k_ddg, (B,), jnp.float32)
    params = init_readout_params(k_par, D)

    loss_r, pred_r, pred_inv_r = ddg_forward_ref(h_wt, h_mt, params, ddg_true)

    # Small-tile config: multi-step L grid, tail masking, deep buffering path.
    loss, pred, pred_inv = ddg_forward(h_wt, h_mt, params, ddg_true, max_rows=8)
    jax.block_until_ready((loss, pred, pred_inv))
    np.testing.assert_allclose(np.asarray(pred), np.asarray(pred_r), rtol=1e-5, atol=1e-5)
    np.testing.assert_allclose(np.asarray(pred_inv), np.asarray(pred_inv_r), rtol=1e-5, atol=1e-5)
    np.testing.assert_allclose(np.asarray(loss), np.asarray(loss_r), rtol=1e-5, atol=1e-5)

    # Default (VMEM-budgeted large tile) config: single masked step at these shapes.
    loss2, pred2, pred_inv2 = ddg_forward(h_wt, h_mt, params, ddg_true)
    jax.block_until_ready((loss2, pred2, pred_inv2))
    np.testing.assert_allclose(np.asarray(pred2), np.asarray(pred_r), rtol=1e-5, atol=1e-5)
    np.testing.assert_allclose(np.asarray(pred_inv2), np.asarray(pred_inv_r), rtol=1e-5, atol=1e-5)
    np.testing.assert_allclose(np.asarray(loss2), np.asarray(loss_r), rtol=1e-5, atol=1e-5)

    print("KERNEL_OK")
</pallas_src>

<mosaic_0001>
module attributes {stable_mosaic.version = 11 : i64} {
  func.func @_ddg_kernel(%arg0: i32, %arg1: i32, %arg2: memref<1x8x128xf32, #tpu.memory_space<vmem>>, %arg3: memref<1x8x128xf32, #tpu.memory_space<vmem>>, %arg4: memref<32x32xf32, #tpu.memory_space<vmem>>, %arg5: memref<32x32xf32, #tpu.memory_space<vmem>>, %arg6: memref<8x32xf32, #tpu.memory_space<vmem>>, %arg7: memref<1x8x128xf32, #tpu.memory_space<vmem>>, %arg8: memref<1x8x128xf32, #tpu.memory_space<vmem>>, %arg9: memref<1x8x128xf32, #tpu.memory_space<vmem>>) attributes {dimension_semantics = [#tpu.dimension_semantics<parallel>, #tpu.dimension_semantics<arbitrary>], iteration_bounds = array<i64: 2, 5>, scalar_prefetch = 0 : i64, scratch_operands = 2 : i64, tpu.core_type = #tpu.core_type<tc>, window_params = [{transform_indices = @transform_0, window_bounds = array<i64: 1, 8, 128>}, {transform_indices = @transform_1, window_bounds = array<i64: 1, 8, 128>}, {pipeline_mode = #tpu.pipeline_mode<synchronous>, transform_indices = @transform_2, window_bounds = array<i64: 32, 32>}, {pipeline_mode = #tpu.pipeline_mode<synchronous>, transform_indices = @transform_3, window_bounds = array<i64: 32, 32>}, {pipeline_mode = #tpu.pipeline_mode<synchronous>, transform_indices = @transform_4, window_bounds = array<i64: 8, 32>}, {transform_indices = @transform_5, window_bounds = array<i64: 1, 8, 128>}]} {
    %c0_i32 = arith.constant 0 : i32
    %0 = arith.cmpi eq, %arg1, %c0_i32 : i32
    %1 = arith.extui %0 : i1 to i32
    %c0_i32_0 = arith.constant 0 : i32
    %2 = arith.cmpi ne, %1, %c0_i32_0 : i32
    scf.if %2 {
      %cst = arith.constant 0xFF800000 : f32
      %12 = vector.broadcast %cst : f32 to vector<1x8x128xf32>
      %c0 = arith.constant 0 : index
      %c0_6 = arith.constant 0 : index
      %c0_7 = arith.constant 0 : index
      %13 = vector.load %arg8[%c0, %c0_6, %c0_7] : memref<1x8x128xf32, #tpu.memory_space<vmem>>, vector<1x8x128xf32>
      tpu.vector_store %arg8[%c0, %c0_6, %c0_7], %12 {strides = array<i32>} : memref<1x8x128xf32, #tpu.memory_space<vmem>>, vector<1x8x128xf32>,
      %cst_8 = arith.constant 0xFF800000 : f32
      %14 = vector.broadcast %cst_8 : f32 to vector<1x8x128xf32>
      %c0_9 = arith.constant 0 : index
      %c0_10 = arith.constant 0 : index
      %c0_11 = arith.constant 0 : index
      %15 = vector.load %arg9[%c0_9, %c0_10, %c0_11] : memref<1x8x128xf32, #tpu.memory_space<vmem>>, vector<1x8x128xf32>
      tpu.vector_store %arg9[%c0_9, %c0_10, %c0_11], %14 {strides = array<i32>} : memref<1x8x128xf32, #tpu.memory_space<vmem>>, vector<1x8x128xf32>,
    } else {
    }
    %c4_i32 = arith.constant 4 : i32
    %3 = arith.cmpi slt, %arg1, %c4_i32 : i32
    %4 = arith.extui %3 : i1 to i32
    %c0_i32_1 = arith.constant 0 : i32
    %5 = arith.cmpi ne, %4, %c0_i32_1 : i32
    scf.if %5 {
      %c0 = arith.constant 0 : index
      %c0_6 = arith.constant 0 : index
      %c0_7 = arith.constant 0 : index
      %12 = vector.load %arg2[%c0, %c0_6, %c0_7] : memref<1x8x128xf32, #tpu.memory_space<vmem>>, vector<1x8x128xf32>
      %13 = vector.shape_cast %12 : vector<1x8x128xf32> to vector<1x1x8x128xf32>
      %cst = arith.constant dense<0xFF800000> : vector<1x8x128xf32>
      %14 = vector.multi_reduction <maximumf>, %13, %cst [1] : vector<1x1x8x128xf32> to vector<1x8x128xf32>
      %c0_8 = arith.constant 0 : index
      %c0_9 = arith.constant 0 : index
      %c0_10 = arith.constant 0 : index
      %15 = vector.load %arg8[%c0_8, %c0_9, %c0_10] : memref<1x8x128xf32, #tpu.memory_space<vmem>>, vector<1x8x128xf32>
      %16 = arith.maximumf %15, %14 : vector<1x8x128xf32>
      %c0_11 = arith.constant 0 : index
      %c0_12 = arith.constant 0 : index
      %c0_13 = arith.constant 0 : index
      %17 = vector.load %arg8[%c0_11, %c0_12, %c0_13] : memref<1x8x128xf32, #tpu.memory_space<vmem>>, vector<1x8x128xf32>
      tpu.vector_store %arg8[%c0_11, %c0_12, %c0_13], %16 {strides = array<i32>} : memref<1x8x128xf32, #tpu.memory_space<vmem>>, vector<1x8x128xf32>,
      %c0_14 = arith.constant 0 : index
      %c0_15 = arith.constant 0 : index
      %c0_16 = arith.constant 0 : index
      %18 = vector.load %arg3[%c0_14, %c0_15, %c0_16] : memref<1x8x128xf32, #tpu.memory_space<vmem>>, vector<1x8x128xf32>
      %19 = vector.shape_cast %18 : vector<1x8x128xf32> to vector<1x1x8x128xf32>
      %cst_17 = arith.constant dense<0xFF800000> : vector<1x8x128xf32>
      %20 = vector.multi_reduction <maximumf>, %19, %cst_17 [1] : vector<1x1x8x128xf32> to vector<1x8x128xf32>
      %c0_18 = arith.constant 0 : index
      %c0_19 = arith.constant 0 : index
      %c0_20 = arith.constant 0 : index
      %21 = vector.load %arg9[%c0_18, %c0_19, %c0_20] : memref<1x8x128xf32, #tpu.memory_space<vmem>>, vector<1x8x128xf32>
      %22 = arith.maximumf %21, %20 : vector<1x8x128xf32>
      %c0_21 = arith.constant 0 : index
      %c0_22 = arith.constant 0 : index
      %c0_23 = arith.constant 0 : index
      %23 = vector.load %arg9[%c0_21, %c0_22, %c0_23] : memref<1x8x128xf32, #tpu.memory_space<vmem>>, vector<1x8x128xf32>
      tpu.vector_store %arg9[%c0_21, %c0_22, %c0_23], %22 {strides = array<i32>} : memref<1x8x128xf32, #tpu.memory_space<vmem>>, vector<1x8x128xf32>,
    } else {
    }
    %c4_i32_2 = arith.constant 4 : i32
    %6 = arith.cmpi eq, %arg1, %c4_i32_2 : i32
    %7 = arith.extui %6 : i1 to i32
    %c0_i32_3 = arith.constant 0 : i32
    %8 = arith.cmpi ne, %7, %c0_i32_3 : i32
    scf.if %8 {
      %c0 = arith.constant 0 : index
      %c0_6 = arith.constant 0 : index
      %c0_7 = arith.constant 0 : index
      %12 = vector.load %arg2[%c0, %c0_6, %c0_7] : memref<1x8x128xf32, #tpu.memory_space<vmem>>, vector<1x8x128xf32>
      %13 = tpu.iota {dimensions = array<i32: 1>} : vector<1x8x128xi32>
      %c2_i32 = arith.constant 2 : i32
      %14 = vector.broadcast %c2_i32 : i32 to vector<1x8x128xi32>
      %15 = arith.cmpi slt, %13, %14 : vector<1x8x128xi32>
      %cst = arith.constant 0xFF800000 : f32
      %16 = vector.broadcast %cst : f32 to vector<1x8x128xf32>
      %17 = arith.select %15, %12, %16 : vector<1x8x128xi1>, vector<1x8x128xf32>
      %18 = vector.shape_cast %17 : vector<1x8x128xf32> to vector<1x1x8x128xf32>
      %cst_8 = arith.constant dense<0xFF800000> : vector<1x8x128xf32>
      %19 = vector.multi_reduction <maximumf>, %18, %cst_8 [1] : vector<1x1x8x128xf32> to vector<1x8x128xf32>
      %c0_9 = arith.constant 0 : index
      %c0_10 = arith.constant 0 : index
      %c0_11 = arith.constant 0 : index
      %20 = vector.load %arg8[%c0_9, %c0_10, %c0_11] : memref<1x8x128xf32, #tpu.memory_space<vmem>>, vector<1x8x128xf32>
      %21 = arith.maximumf %20, %19 : vector<1x8x128xf32>
      %c0_12 = arith.constant 0 : index
      %c0_13 = arith.constant 0 : index
      %c0_14 = arith.constant 0 : index
      %22 = vector.load %arg8[%c0_12, %c0_13, %c0_14] : memref<1x8x128xf32, #tpu.memory_space<vmem>>, vector<1x8x128xf32>
      tpu.vector_store %arg8[%c0_12, %c0_13, %c0_14], %21 {strides = array<i32>} : memref<1x8x128xf32, #tpu.memory_space<vmem>>, vector<1x8x128xf32>,
      %c0_15 = arith.constant 0 : index
      %c0_16 = arith.constant 0 : index
      %c0_17 = arith.constant 0 : index
      %23 = vector.load %arg3[%c0_15, %c0_16, %c0_17] : memref<1x8x128xf32, #tpu.memory_space<vmem>>, vector<1x8x128xf32>
      %24 = tpu.iota {dimensions = array<i32: 1>} : vector<1x8x128xi32>
      %c2_i32_18 = arith.constant 2 : i32
      %25 = vector.broadcast %c2_i32_18 : i32 to vector<1x8x128xi32>
      %26 = arith.cmpi slt, %24, %25 : vector<1x8x128xi32>
      %cst_19 = arith.constant 0xFF800000 : f32
      %27 = vector.broadcast %cst_19 : f32 to vector<1x8x128xf32>
      %28 = arith.select %26, %23, %27 : vector<1x8x128xi1>, vector<1x8x128xf32>
      %29 = vector.shape_cast %28 : vector<1x8x128xf32> to vector<1x1x8x128xf32>
      %cst_20 = arith.constant dense<0xFF800000> : vector<1x8x128xf32>
      %30 = vector.multi_reduction <maximumf>, %29, %cst_20 [1] : vector<1x1x8x128xf32> to vector<1x8x128xf32>
      %c0_21 = arith.constant 0 : index
      %c0_22 = arith.constant 0 : index
      %c0_23 = arith.constant 0 : index
      %31 = vector.load %arg9[%c0_21, %c0_22, %c0_23] : memref<1x8x128xf32, #tpu.memory_space<vmem>>, vector<1x8x128xf32>
      %32 = arith.maximumf %31, %30 : vector<1x8x128xf32>
      %c0_24 = arith.constant 0 : index
      %c0_25 = arith.constant 0 : index
      %c0_26 = arith.constant 0 : index
      %33 = vector.load %arg9[%c0_24, %c0_25, %c0_26] : memref<1x8x128xf32, #tpu.memory_space<vmem>>, vector<1x8x128xf32>
      tpu.vector_store %arg9[%c0_24, %c0_25, %c0_26], %32 {strides = array<i32>} : memref<1x8x128xf32, #tpu.memory_space<vmem>>, vector<1x8x128xf32>,
    } else {
    }
    %c4_i32_4 = arith.constant 4 : i32
    %9 = arith.cmpi eq, %arg1, %c4_i32_4 : i32
    %10 = arith.extui %9 : i1 to i32
    %c0_i32_5 = arith.constant 0 : i32
    %11 = arith.cmpi ne, %10, %c0_i32_5 : i32
    scf.if %11 {
      %c0 = arith.constant 0 : index
      %c0_6 = arith.constant 0 : index
      %c0_7 = arith.constant 0 : index
      %12 = vector.load %arg8[%c0, %c0_6, %c0_7] : memref<1x8x128xf32, #tpu.memory_space<vmem>>, vector<1x8x128xf32>
      %cst = arith.constant dense<0xFF800000> : vector<1x128xf32>
      %13 = vector.multi_reduction <maximumf>, %12, %cst [1] : vector<1x8x128xf32> to vector<1x128xf32>
      %c64_i32 = arith.constant 64 : i32
      %14 = tpu.dynamic_rotate %13 by %c64_i32 dim 1 : vector<1x128xf32>, i32 -> vector<1x128xf32>
      %15 = arith.maximumf %13, %14 : vector<1x128xf32>
      %c32_i32 = arith.constant 32 : i32
      %16 = tpu.dynamic_rotate %15 by %c32_i32 dim 1 : vector<1x128xf32>, i32 -> vector<1x128xf32>
      %17 = arith.maximumf %15, %16 : vector<1x128xf32>
      %18 = vector.extract_strided_slice %17 {offsets = [0, 0], sizes = [1, 32], strides = [1, 1]} : vector<1x128xf32> to vector<1x32xf32>
      %c0_8 = arith.constant 0 : index
      %c0_9 = arith.constant 0 : index
      %c0_10 = arith.constant 0 : index
      %19 = vector.load %arg9[%c0_8, %c0_9, %c0_10] : memref<1x8x128xf32, #tpu.memory_space<vmem>>, vector<1x8x128xf32>
      %cst_11 = arith.constant dense<0xFF800000> : vector<1x128xf32>
      %20 = vector.multi_reduction <maximumf>, %19, %cst_11 [1] : vector<1x8x128xf32> to vector<1x128xf32>
      %c64_i32_12 = arith.constant 64 : i32
      %21 = tpu.dynamic_rotate %20 by %c64_i32_12 dim 1 : vector<1x128xf32>, i32 -> vector<1x128xf32>
      %22 = arith.maximumf %20, %21 : vector<1x128xf32>
      %c32_i32_13 = arith.constant 32 : i32
      %23 = tpu.dynamic_rotate %22 by %c32_i32_13 dim 1 : vector<1x128xf32>, i32 -> vector<1x128xf32>
      %24 = arith.maximumf %22, %23 : vector<1x128xf32>
      %25 = vector.extract_strided_slice %24 {offsets = [0, 0], sizes = [1, 32], strides = [1, 1]} : vector<1x128xf32> to vector<1x32xf32>
      %26 = arith.subf %25, %18 : vector<1x32xf32>
      %cst_14 = arith.constant 0.000000e+00 : f32
      %27 = vector.broadcast %cst_14 : f32 to vector<1x32xf32>
      %28 = arith.subf %27, %26 : vector<1x32xf32>
      %29 = tpu.concatenate %26, %28 in 0 : vector<1x32xf32>, vector<1x32xf32> -> vector<2x32xf32>
      %c0_15 = arith.constant 0 : index
      %c0_16 = arith.constant 0 : index
      %30 = vector.load %arg6[%c0_15, %c0_16] : memref<8x32xf32, #tpu.memory_space<vmem>>, vector<1x32xf32>
      %c1 = arith.constant 1 : index
      %c0_17 = arith.constant 0 : index
      %31 = vector.load %arg6[%c1, %c0_17] : memref<8x32xf32, #tpu.memory_space<vmem>>, vector<1x32xf32>
      %c2 = arith.constant 2 : index
      %c0_18 = arith.constant 0 : index
      %32 = vector.load %arg6[%c2, %c0_18] : memref<8x32xf32, #tpu.memory_space<vmem>>, vector<1x32xf32>
      %c3 = arith.constant 3 : index
      %c0_19 = arith.constant 0 : index
      %33 = vector.load %arg6[%c3, %c0_19] : memref<8x32xf32, #tpu.memory_space<vmem>>, vector<1x1xf32>
      %c0_20 = arith.constant 0 : index
      %c0_21 = arith.constant 0 : index
      %34 = vector.load %arg4[%c0_20, %c0_21] : memref<32x32xf32, #tpu.memory_space<vmem>>, vector<32x32xf32>
      %cst_22 = arith.constant dense<0.000000e+00> : vector<2x32xf32>
      %35 = tpu.matmul %29, %34, %cst_22 {dimension_numbers = #tpu.dot_dimension_numbers<[1], [0], [0], [1], [0, 0, 1, 1], [], []>} : vector<2x32xf32>, vector<32x32xf32>, vector<2x32xf32> -> vector<2x32xf32>
      %36 = vector.broadcast %30 : vector<1x32xf32> to vector<2x32xf32>
      %37 = arith.addf %35, %36 : vector<2x32xf32>
      %38 = arith.addf %37, %29 : vector<2x32xf32>
      %cst_23 = arith.constant 0.000000e+00 : f32
      %39 = vector.broadcast %cst_23 : f32 to vector<2x32xf32>
      %40 = arith.maximumf %38, %39 : vector<2x32xf32>
      %c0_24 = arith.constant 0 : index
      %c0_25 = arith.constant 0 : index
      %41 = vector.load %arg5[%c0_24, %c0_25] : memref<32x32xf32, #tpu.memory_space<vmem>>, vector<32x32xf32>
      %cst_26 = arith.constant dense<0.000000e+00> : vector<2x32xf32>
      %42 = tpu.matmul %40, %41, %cst_26 {dimension_numbers = #tpu.dot_dimension_numbers<[1], [0], [0], [1], [0, 0, 1, 1], [], []>} : vector<2x32xf32>, vector<32x32xf32>, vector<2x32xf32> -> vector<2x32xf32>
      %43 = vector.broadcast %31 : vector<1x32xf32> to vector<2x32xf32>
      %44 = arith.addf %42, %43 : vector<2x32xf32>
      %45 = arith.addf %44, %40 : vector<2x32xf32>
      %cst_27 = arith.constant 0.000000e+00 : f32
      %46 = vector.broadcast %cst_27 : f32 to vector<2x32xf32>
      %47 = arith.maximumf %45, %46 : vector<2x32xf32>
      %48 = vector.broadcast %32 : vector<1x32xf32> to vector<2x32xf32>
      %49 = arith.mulf %47, %48 : vector<2x32xf32>
      %cst_28 = arith.constant dense<0.000000e+00> : vector<2xf32>
      %50 = vector.multi_reduction <add>, %49, %cst_28 [1] : vector<2x32xf32> to vector<2xf32>
      %51 = vector.shape_cast %50 : vector<2xf32> to vector<2x1xf32>
      %52 = vector.broadcast %33 : vector<1x1xf32> to vector<2x1xf32>
      %53 = arith.addf %51, %52 : vector<2x1xf32>
      %54 = vector.shape_cast %53 : vector<2x1xf32> to vector<2x1xf32>
      %55 = vector.broadcast %54 : vector<2x1xf32> to vector<2x128xf32>
      %cst_29 = arith.constant 0.000000e+00 : f32
      %56 = vector.broadcast %cst_29 : f32 to vector<6x128xf32>
      %57 = tpu.concatenate %55, %56 in 0 : vector<2x128xf32>, vector<6x128xf32> -> vector<8x128xf32>
      %c0_30 = arith.constant 0 : index
      %c0_31 = arith.constant 0 : index
      %c0_32 = arith.constant 0 : index
      %58 = vector.load %arg7[%c0_30, %c0_31, %c0_32] : memref<1x8x128xf32, #tpu.memory_space<vmem>>, vector<1x8x128xf32>
      %59 = vector.shape_cast %58 : vector<1x8x128xf32> to vector<8x128xf32>
      %60 = vector.shape_cast %57 : vector<8x128xf32> to vector<1x8x128xf32>
      tpu.vector_store %arg7[%c0_30, %c0_31, %c0_32], %60 {strides = array<i32>} : memref<1x8x128xf32, #tpu.memory_space<vmem>>, vector<1x8x128xf32>,
    } else {
    }
    return
  }
  func.func @transform_0(%arg0: i32, %arg1: i32) -> (i32, i32, i32) {
    %c0_i32 = arith.constant 0 : i32
    %c0_i32_0 = arith.constant 0 : i32
    return %arg0, %arg1, %c0_i32 : i32, i32, i32
  }
  func.func @transform_1(%arg0: i32, %arg1: i32) -> (i32, i32, i32) {
    %c0_i32 = arith.constant 0 : i32
    %c0_i32_0 = arith.constant 0 : i32
    return %arg0, %arg1, %c0_i32 : i32, i32, i32
  }
  func.func @transform_2(%arg0: i32, %arg1: i32) -> (i32, i32) {
    %c0_i32 = arith.constant 0 : i32
    %c0_i32_0 = arith.constant 0 : i32
    %c0_i32_1 = arith.constant 0 : i32
    return %c0_i32, %c0_i32_0 : i32, i32
  }
  func.func @transform_3(%arg0: i32, %arg1: i32) -> (i32, i32) {
    %c0_i32 = arith.constant 0 : i32
    %c0_i32_0 = arith.constant 0 : i32
    %c0_i32_1 = arith.constant 0 : i32
    return %c0_i32, %c0_i32_0 : i32, i32
  }
  func.func @transform_4(%arg0: i32, %arg1: i32) -> (i32, i32) {
    %c0_i32 = arith.constant 0 : i32
    %c0_i32_0 = arith.constant 0 : i32
    %c0_i32_1 = arith.constant 0 : i32
    return %c0_i32, %c0_i32_0 : i32, i32
  }
  func.func @transform_5(%arg0: i32, %arg1: i32) -> (i32, i32, i32) {
    %c0_i32 = arith.constant 0 : i32
    %c0_i32_0 = arith.constant 0 : i32
    %c0_i32_1 = arith.constant 0 : i32
    return %arg0, %c0_i32, %c0_i32_0 : i32, i32, i32
  }
}

</mosaic_0001>

<llo_original>
// kernel: tpu_custom_call.1
$region0: #{tpu_custom_call.1}
  #allocation0 [shape = 'u32[]', space=smem, size = 0x4, offset = 0x4, fixed_abs, tag = 'smem constant byte address 0x4 - core index']
  #allocation1 [shape = 'u32[144,128]{1,0:T(1,128)}', space=vmem, size = 0x12000, scoped, tag = 'internal scratch']
  #allocation2 [shape = 'f32[1,8,128]{2,1,0:T(8,128)}', space=vmem, size = 0x1000, scoped, tag = 'scratch operand']
  #allocation3 [shape = 'f32[1,8,128]{2,1,0:T(8,128)}', space=vmem, size = 0x1000, scoped, tag = 'scratch operand']
  %s0 = inlined_call_operand.vmem [shape: f32[2,34,128], index: 0, kind: input, shape index: {}]
  %s1 = inlined_call_operand.vmem [shape: f32[2,34,128], index: 1, kind: input, shape index: {}]
  %s2 = inlined_call_operand.vmem [shape: f32[32,32], index: 2, kind: input, shape index: {}]
  %s3 = inlined_call_operand.vmem [shape: f32[32,32], index: 3, kind: input, shape index: {}]
  %s4 = inlined_call_operand.vmem [shape: f32[8,32], index: 4, kind: input, shape index: {}]
  %s5 = inlined_call_operand.hbm [shape: f32[2,8,128], index: 5, kind: output, shape index: {}]
  %s6 = sld [smem:[#allocation0]]
  $region65: #{tpu_custom_call.1} parent=0
    _
  %s8 = ssub.s32 1, %s6
  %s9 = scalar_select 0, %s8, %s6
  $region1: #{tpu_custom_call.1} parent=0
    #allocation4 [shape = 'u8[8192]{0}', space=vmem, size = 0x2000, scoped, tag = 'output window, operand 0']
    #allocation5 [shape = 's32[2]{0}', space=sflag, size = 0x8, scoped, tag = 'scoped memory for tpu_custom_call.1']
    %10 = vsyncpa [#allocation5], 0
    %s11 = scalar_lea.sflag [#allocation5], 1
    %12 = vsyncpa %s11, 0
    loop: start=0, step=1, limit=12
    $region2: #{tpu_custom_call.1} parent=1 // loop_pre_header
      _
    $region3: #{tpu_custom_call.1} parent=1 // loop_header
      %s14 = sphi 0, %s18
      %p15 = scmp.ge.s32.totalorder %s14, 12
      %s21 = sphi 0, %s33
      %s22 = sphi 0, %s29
      %s23 = sphi 0, %s21
      %s24 = sphi 0, %s22
      %s25 = sphi 0, %s23
      %s26 = sphi 0, %s24
      %s38 = sphi 0, %s40
      %s41 = sphi 0, %s38
      %s42 = sphi 0, %s41
      %s58 = sphi 0, %s42
      %s66 = sphi 0, %s68
      %s69 = sphi 0, %s66
      %s70 = sphi 0, %s69
      %s86 = sphi 0, %s70
      %s90 = sphi 0, %s90
      %s92 = sphi 0, %s90
      %s93 = sphi 0, %s92
      %s107 = sphi 0, %s93
      %s111 = sphi 0, %s111
      %s113 = sphi 0, %s111
      %s114 = sphi 0, %s113
      %s128 = sphi 0, %s114
      %s132 = sphi 0, %s132
      %s134 = sphi 0, %s132
      %s135 = sphi 0, %s134
      %s149 = sphi 0, %s135
      %s155 = sphi 0, %s157
      %s158 = sphi 0, %s155
      %s159 = sphi 0, %s158
      %s175 = sphi 0, %s159
    $region4: #{tpu_custom_call.1} parent=1 // loop_header_branch
      %17 = sbr.rel (%p15) target = $region8
    $region5: #{tpu_custom_call.1} parent=1 // loop_body
      %s19 = ssub.s32 %s14, 1
      %s20 = ssub.s32 %s14, 2
      %s27 = sadd.s32 1, %s22
      %p28 = scmp.ge.s32.totalorder %s27, 5
      %s29 = scalar_select %p28, 0, %s27
      %s30 = sadd.s32 1, %s21
      %s31 = scalar_select %p28, %s30, %s21
      %p32 = scmp.ge.s32.totalorder %s31, 2
      %s33 = scalar_select %p32, 0, %s31
      %s34 = ssub.s32 %s21, %s33
      %s35 = ssub.s32 %s22, %s29
      %s36 = sor.u32 %s34, %s35
      %p37 = scmp.eq.s32.totalorder %s36, 0
      %s39 = sadd.s32 %s38, 1
      %s40 = scalar_select %p37, %s38, %s39
      %p43 = pneg %p37
      %p44 = scmp.eq.s32.totalorder %s14, 9
      %p45 = por %p43, %p44
      %p46 = scmp.ne.s32.totalorder %s38, %s41
      %p47 = scmp.eq.s32.totalorder %s14, 0
      %p48 = por %p46, %p47
      %p49 = scmp.ne.s32.totalorder %s38, %s41
      %p50 = scmp.eq.s32.totalorder %s19, 9
      %p51 = por %p49, %p50
      %p52 = scmp.ne.s32.totalorder %s41, %s42
      %p53 = scmp.eq.s32.totalorder %s19, 0
      %p54 = por %p52, %p53
      %p55 = scmp.ne.s32.totalorder %s41, %s42
      %p56 = scmp.eq.s32.totalorder %s20, 9
      %p57 = por %p55, %p56
      %p59 = scmp.ne.s32.totalorder %s42, %s58
      %p60 = scmp.eq.s32.totalorder %s20, 0
      %p61 = por %p59, %p60
      %s62 = ssub.s32 %s21, %s33
      %s63 = ssub.s32 %s22, %s29
      %s64 = sor.u32 %s62, %s63
      %p65 = scmp.eq.s32.totalorder %s64, 0
      %s67 = sadd.s32 %s66, 1
      %s68 = scalar_select %p65, %s66, %s67
      %p71 = pneg %p65
      %p72 = scmp.eq.s32.totalorder %s14, 9
      %p73 = por %p71, %p72
      %p74 = scmp.ne.s32.totalorder %s66, %s69
      %p75 = scmp.eq.s32.totalorder %s14, 0
      %p76 = por %p74, %p75
      %p77 = scmp.ne.s32.totalorder %s66, %s69
      %p78 = scmp.eq.s32.totalorder %s19, 9
      %p79 = por %p77, %p78
      %p80 = scmp.ne.s32.totalorder %s69, %s70
      %p81 = scmp.eq.s32.totalorder %s19, 0
      %p82 = por %p80, %p81
      %p83 = scmp.ne.s32.totalorder %s69, %s70
      %p84 = scmp.eq.s32.totalorder %s20, 9
      %p85 = por %p83, %p84
      %p87 = scmp.ne.s32.totalorder %s70, %s86
      %p88 = scmp.eq.s32.totalorder %s20, 0
      %p89 = por %p87, %p88
      %s91 = sadd.s32 %s90, 1
      %p94 = scmp.eq.s32.totalorder %s14, 9
      %p95 = scmp.ne.s32.totalorder %s90, %s92
      %p96 = scmp.eq.s32.totalorder %s14, 0
      %p97 = por %p95, %p96
      %p98 = scmp.ne.s32.totalorder %s90, %s92
      %p99 = scmp.eq.s32.totalorder %s19, 9
      %p100 = por %p98, %p99
      %p101 = scmp.ne.s32.totalorder %s92, %s93
      %p102 = scmp.eq.s32.totalorder %s19, 0
      %p103 = por %p101, %p102
      %p104 = scmp.ne.s32.totalorder %s92, %s93
      %p105 = scmp.eq.s32.totalorder %s20, 9
      %p106 = por %p104, %p105
      %p108 = scmp.ne.s32.totalorder %s93, %s107
      %p109 = scmp.eq.s32.totalorder %s20, 0
      %p110 = por %p108, %p109
      %s112 = sadd.s32 %s111, 1
      %p115 = scmp.eq.s32.totalorder %s14, 9
      %p116 = scmp.ne.s32.totalorder %s111, %s113
      %p117 = scmp.eq.s32.totalorder %s14, 0
      %p118 = por %p116, %p117
      %p119 = scmp.ne.s32.totalorder %s111, %s113
      %p120 = scmp.eq.s32.totalorder %s19, 9
      %p121 = por %p119, %p120
      %p122 = scmp.ne.s32.totalorder %s113, %s114
      %p123 = scmp.eq.s32.totalorder %s19, 0
      %p124 = por %p122, %p123
      %p125 = scmp.ne.s32.totalorder %s113, %s114
      %p126 = scmp.eq.s32.totalorder %s20, 9
      %p127 = por %p125, %p126
      %p129 = scmp.ne.s32.totalorder %s114, %s128
      %p130 = scmp.eq.s32.totalorder %s20, 0
      %p131 = por %p129, %p130
      %s133 = sadd.s32 %s132, 1
      %p136 = scmp.eq.s32.totalorder %s14, 9
      %p137 = scmp.ne.s32.totalorder %s132, %s134
      %p138 = scmp.eq.s32.totalorder %s14, 0
      %p139 = por %p137, %p138
      %p140 = scmp.ne.s32.totalorder %s132, %s134
      %p141 = scmp.eq.s32.totalorder %s19, 9
      %p142 = por %p140, %p141
      %p143 = scmp.ne.s32.totalorder %s134, %s135
      %p144 = scmp.eq.s32.totalorder %s19, 0
      %p145 = por %p143, %p144
      %p146 = scmp.ne.s32.totalorder %s134, %s135
      %p147 = scmp.eq.s32.totalorder %s20, 9
      %p148 = por %p146, %p147
      %p150 = scmp.ne.s32.totalorder %s135, %s149
      %p151 = scmp.eq.s32.totalorder %s20, 0
      %p152 = por %p150, %p151
      %s153 = ssub.s32 %s21, %s33
      %p154 = scmp.eq.s32.totalorder %s153, 0
      %s156 = sadd.s32 %s155, 1
      %s157 = scalar_select %p154, %s155, %s156
      %p160 = pneg %p154
      %p161 = scmp.eq.s32.totalorder %s14, 9
      %p162 = por %p160, %p161
      %p163 = scmp.ne.s32.totalorder %s155, %s158
      %p164 = scmp.eq.s32.totalorder %s14, 0
      %p165 = por %p163, %p164
      %p166 = scmp.ne.s32.totalorder %s155, %s158
      %p167 = scmp.eq.s32.totalorder %s19, 9
      %p168 = por %p166, %p167
      %p169 = scmp.ne.s32.totalorder %s158, %s159
      %p170 = scmp.eq.s32.totalorder %s19, 0
      %p171 = por %p169, %p170
      %p172 = scmp.ne.s32.totalorder %s158, %s159
      %p173 = scmp.eq.s32.totalorder %s20, 9
      %p174 = por %p172, %p173
      %p176 = scmp.ne.s32.totalorder %s159, %s175
      %p177 = scmp.eq.s32.totalorder %s20, 0
      %p178 = por %p176, %p177
      %p179 = scmp.le.s32.totalorder 1, %s14
      %p180 = scmp.lt.s32.totalorder %s14, 11
      %p181 = pnand %p179, %p180
      %p182 = pneg %p181
      // Predicated region
      $region9: #{tpu_custom_call.1} parent=5 // pred_check
        _
      $region10: #{tpu_custom_call.1} parent=5 // pred_check_branch
        %184 = sbr.rel (%p181) target = $region12
      $region11: #{tpu_custom_call.1} parent=5 // pred_region
        %s185 = ssub.s32 %s14, 1
        // Predicated region
        $region13: #{tpu_custom_call.1} parent=11 // pred_check
          %p186 = pneg %p103
        $region14: #{tpu_custom_call.1} parent=11 // pred_check_branch
          %188 = sbr.rel (%p186) target = $region16
        $region15: #{tpu_custom_call.1} parent=11 // pred_region
          _
        $region16: #{tpu_custom_call.1} parent=11 // pred_fallthru
          _
        // Predicated region
        $region17: #{tpu_custom_call.1} parent=11 // pred_check
          %p189 = pneg %p124
        $region18: #{tpu_custom_call.1} parent=11 // pred_check_branch
          %191 = sbr.rel (%p189) target = $region20
        $region19: #{tpu_custom_call.1} parent=11 // pred_region
          _
        $region20: #{tpu_custom_call.1} parent=11 // pred_fallthru
          _
        // Predicated region
        $region21: #{tpu_custom_call.1} parent=11 // pred_check
          %p192 = pneg %p145
        $region22: #{tpu_custom_call.1} parent=11 // pred_check_branch
          %194 = sbr.rel (%p192) target = $region24
        $region23: #{tpu_custom_call.1} parent=11 // pred_region
          _
        $region24: #{tpu_custom_call.1} parent=11 // pred_fallthru
          _
      $region12: #{tpu_custom_call.1} parent=5 // pred_fallthru
        _
      %p195 = scmp.lt.s32.totalorder %s14, 10
      // Predicated region
      $region25: #{tpu_custom_call.1} parent=5 // pred_check
        %p196 = pneg %p195
      $region26: #{tpu_custom_call.1} parent=5 // pred_check_branch
        %198 = sbr.rel (%p196) target = $region28
      $region27: #{tpu_custom_call.1} parent=5 // pred_region
        // Predicated region
        $region29: #{tpu_custom_call.1} parent=27 // pred_check
          %p199 = pneg %p48
        $region30: #{tpu_custom_call.1} parent=27 // pred_check_branch
          %201 = sbr.rel (%p199) target = $region32
        $region31: #{tpu_custom_call.1} parent=27 // pred_region
          %p202 = scmp.lt.s32.totalorder %s21, 1
          %s203 = scalar_select %p202, %s21, 1
          %p204 = scmp.lt.s32.totalorder %s22, 4
          %s205 = scalar_select %p204, %s22, 4
          %s206 = smul.addr %s203, 5
          %s207 = sadd.s32 %s205, %s206
          %s208 = smul.addr %s207, 8
          %s209 = scalar_lea.vmem %s0, %s208
        $region32: #{tpu_custom_call.1} parent=27 // pred_fallthru
          _
        // Predicated region
        $region33: #{tpu_custom_call.1} parent=27 // pred_check
          %p210 = pneg %p76
        $region34: #{tpu_custom_call.1} parent=27 // pred_check_branch
          %212 = sbr.rel (%p210) target = $region36
        $region35: #{tpu_custom_call.1} parent=27 // pred_region
          %p213 = scmp.lt.s32.totalorder %s21, 1
          %s214 = scalar_select %p213, %s21, 1
          %p215 = scmp.lt.s32.totalorder %s22, 4
          %s216 = scalar_select %p215, %s22, 4
          %s217 = smul.addr %s214, 5
          %s218 = sadd.s32 %s216, %s217
          %s219 = smul.addr %s218, 8
          %s220 = scalar_lea.vmem %s1, %s219
        $region36: #{tpu_custom_call.1} parent=27 // pred_fallthru
          _
      $region28: #{tpu_custom_call.1} parent=5 // pred_fallthru
        _
      %p221 = scmp.le.s32.totalorder 1, %s14
      %p222 = scmp.lt.s32.totalorder %s14, 11
      %p223 = pnand %p221, %p222
      %p224 = pneg %p223
      // Predicated region
      $region37: #{tpu_custom_call.1} parent=5 // pred_check
        _
      $region38: #{tpu_custom_call.1} parent=5 // pred_check_branch
        %226 = sbr.rel (%p223) target = $region40
      $region39: #{tpu_custom_call.1} parent=5 // pred_region
        %s227 = ssub.s32 %s14, 1
        %p228 = scmp.lt.s32.totalorder %s23, 1
        %s229 = scalar_select %p228, %s23, 1
        %p230 = scmp.lt.s32.totalorder %s24, 4
        %s231 = scalar_select %p230, %s24, 4
        %s232 = smul.addr %s229, 5
        %s233 = sadd.s32 %s231, %s232
        %s234 = smul.addr %s233, 8
        %s235 = scalar_lea.vmem %s0, %s234
        %p236 = pneg %p54
        %p237 = pneg %p51
        %p238 = scmp.lt.s32.totalorder %s23, 1
        %s239 = scalar_select %p238, %s23, 1
        %p240 = scmp.lt.s32.totalorder %s24, 4
        %s241 = scalar_select %p240, %s24, 4
        %s242 = smul.addr %s239, 5
        %s243 = sadd.s32 %s241, %s242
        %s244 = smul.addr %s243, 8
        %s245 = scalar_lea.vmem %s1, %s244
        %p246 = pneg %p82
        %p247 = pneg %p79
        %p248 = pneg %p103
        %p249 = pneg %p100
        %p250 = pneg %p124
        %p251 = pneg %p121
        %p252 = pneg %p145
        %p253 = pneg %p142
        %p254 = pneg %p171
        %p255 = pneg %p168
        %s256 = sand.u32 %s158, 1
        %s257 = scalar_lea.sflag [#allocation5], %s256
        %s258 = sand.u32 %s158, 1
        %s259 = smul.addr %s258, 8
        %s260 = scalar_lea.vmem [#allocation4], %s259
        %p261 = scmp.lt.s32.totalorder %s23, 1
        %s262 = scalar_select %p261, %s23, 1
        %p263 = scmp.lt.s32.totalorder %s24, 4
        %s264 = scalar_select %p263, %s24, 4
        %s265 = smul.addr %s262, 5
        %s266 = sadd.s32 %s264, %s265
        %s267 = smul.addr %s266, 8
        %s268 = scalar_lea.vmem %s0, %s267
        %p269 = scmp.lt.s32.totalorder %s23, 1
        %s270 = scalar_select %p269, %s23, 1
        %p271 = scmp.lt.s32.totalorder %s24, 4
        %s272 = scalar_select %p271, %s24, 4
        %s273 = smul.addr %s270, 5
        %s274 = sadd.s32 %s272, %s273
        %s275 = smul.addr %s274, 8
        %s276 = scalar_lea.vmem %s1, %s275
        %p277 = scmp.eq.s32.totalorder %s24, 0
        // Predicated region
        $region41: #{tpu_custom_call.1} parent=39 // pred_check
          %p278 = pneg %p277
        $region42: #{tpu_custom_call.1} parent=39 // pred_check_branch
          %280 = sbr.rel (%p278) target = $region44
        $region43: #{tpu_custom_call.1} parent=39 // pred_region
          %281 = vst [vmem:[#allocation2] sm:$0xff] -inf
          %282 = vst [vmem:[#allocation3] sm:$0xff] -inf
        $region44: #{tpu_custom_call.1} parent=39 // pred_fallthru
          _
        %p283 = scmp.lt.s32.totalorder %s24, 4
        // Predicated region
        $region45: #{tpu_custom_call.1} parent=39 // pred_check
          %p284 = pneg %p283
        $region46: #{tpu_custom_call.1} parent=39 // pred_check_branch
          %286 = sbr.rel (%p284) target = $region48
        $region47: #{tpu_custom_call.1} parent=39 // pred_region
          %v287 = vld [vmem:[%s268] sm:$0xff]
          %v288 = vld [vmem:[#allocation2] sm:$0xff]
          %v289 = vmax.f32 %v288, %v287
          %290 = vst [vmem:[#allocation2] sm:$0xff] %v289
          %v291 = vld [vmem:[%s276] sm:$0xff]
          %v292 = vld [vmem:[#allocation3] sm:$0xff]
          %v293 = vmax.f32 %v292, %v291
          %294 = vst [vmem:[#allocation3] sm:$0xff] %v293
        $region48: #{tpu_custom_call.1} parent=39 // pred_fallthru
          _
        %p295 = scmp.eq.s32.totalorder %s24, 4
        // Predicated region
        $region49: #{tpu_custom_call.1} parent=39 // pred_check
          %p296 = pneg %p295
        $region50: #{tpu_custom_call.1} parent=39 // pred_check_branch
          %298 = sbr.rel (%p296) target = $region52
        $region51: #{tpu_custom_call.1} parent=39 // pred_region
          %v299 = vld [vmem:[%s268] sm:$0xff]
          %v300 = vlaneseq
          %v301 = vshrl.u32 %v300, 7
          %vm302 = vcmp.lt.s32.totalorder %v301, 2
          %v303 = vsel %vm302, %v299, -inf
          %v304 = vld [vmem:[#allocation2] sm:$0xff]
          %v305 = vmax.f32 %v304, %v303
          %306 = vst [vmem:[#allocation2] sm:$0xff] %v305
          %v307 = vld [vmem:[%s276] sm:$0xff]
          %v308 = vsel %vm302, %v307, -inf
          %v309 = vld [vmem:[#allocation3] sm:$0xff]
          %v310 = vmax.f32 %v309, %v308
          %311 = vst [vmem:[#allocation3] sm:$0xff] %v310
          %v312 = vld [vmem:[#allocation2] sm:$0xff]
          %v313 = vrot.slane %v312, 4
          %v314 = vmax.f32 %v312, %v313
          %v315 = vrot.slane %v314, 2
          %v316 = vmax.f32 %v314, %v315
          %v317 = vrot.slane %v316, 1
          %v318 = vmax.f32 %v316, %v317
          %319 = vrot.lane.b32.xlu0 %v318, 64
          %v320 = vpop.permute.xlu0 %319
          %v321 = vmax.f32 %v318, %v320
          %322 = vrot.lane.b32.xlu0 %v321, 32
          %v323 = vpop.permute.xlu0 %322
          %v324 = vmax.f32 %v321, %v323
          %v325 = vld [vmem:[#allocation3] sm:$0xff]
          %v326 = vrot.slane %v325, 4
          %v327 = vmax.f32 %v325, %v326
          %v328 = vrot.slane %v327, 2
          %v329 = vmax.f32 %v327, %v328
          %v330 = vrot.slane %v329, 1
          %v331 = vmax.f32 %v329, %v330
          %332 = vrot.lane.b32.xlu0 %v331, 64
          %v333 = vpop.permute.xlu0 %332
          %v334 = vmax.f32 %v331, %v333
          %335 = vrot.lane.b32.xlu0 %v334, 32
          %v336 = vpop.permute.xlu0 %335
          %v337 = vmax.f32 %v334, %v336
          %v338 = vsub.f32 %v337, %v324
          %v339 = vsub.f32 0.0, %v338
          %v341 = vrot.slane %v339, 7
          %vm343 = vcmask 1040384
          %v344 = vsel %vm343, %v338, %v341
          %v345 = vld [vmem:[%s4] sm:$0x1]
          %v346 = vld [vmem:[%s4 + $0x1] sm:$0x1]
          %v347 = vld [vmem:[%s4 + $0x2] sm:$0x1]
          %v348 = vld [vmem:[%s4 + $0x3] sm:$0x1]
          %v349 = vld [vmem:[%s2] sm:$0xff]
          %v350 = vld [vmem:[%s2 + $0x8] sm:$0xff]
          %v351 = vld [vmem:[%s2 + $0x10] sm:$0xff]
          %v352 = vld [vmem:[%s2 + $0x18] sm:$0xff]
          %v353 = vlaneseq
          %v354 = vshrl.u32 %v353, 7
          %v355 = vsub.s32 0, %v354
          %v356 = vrot.slane %v345, %v355
          %vm357 = vcmask 261120
          %v359 = vsel %vm357, %v344, 0
          %361 = vmatprep.subr.mxu0 0.0
          %362 = vmatpush1.msra.mxu0 %v349
          %363 = vmatprep.subr.mxu0 0.0
          %364 = vmatpush1.msra.mxu0 %v350
          %365 = vmatprep.subr.mxu0 0.0
          %366 = vmatpush1.msra.mxu0 %v351
          %367 = vmatprep.subr.mxu0 0.0
          %368 = vmatpush1.msra.mxu0 %v352
          %369 = vmatprep.subr.mxu0 0.0
          %370 = vmatpush1.msra.mxu0 0.0
          %371 = vmatprep.subr.mxu0 0.0
          %372 = vmatpush1.msra.mxu0 0.0
          %373 = vmatprep.subr.mxu0 0.0
          %374 = vmatpush1.msra.mxu0 0.0
          %375 = vmatprep.subr.mxu0 0.0
          %376 = vmatpush1.msra.mxu0 0.0
          %377 = vmatprep.subr.mxu0 0.0
          %378 = vmatpush1.msra.mxu0 0.0
          %379 = vmatprep.subr.mxu0 0.0
          %380 = vmatpush1.msra.mxu0 0.0
          %381 = vmatprep.subr.mxu0 0.0
          %382 = vmatpush1.msra.mxu0 0.0
          %383 = vmatprep.subr.mxu0 0.0
          %384 = vmatpush1.msra.mxu0 0.0
          %385 = vmatprep.subr.mxu0 0.0
          %386 = vmatpush1.msra.mxu0 0.0
          %387 = vmatprep.subr.mxu0 0.0
          %388 = vmatpush1.msra.mxu0 0.0
          %389 = vmatprep.subr.mxu0 0.0
          %390 = vmatpush1.msra.mxu0 0.0
          %391 = vmatprep.subr.mxu0 0.0
          %392 = vmatpush1.msra.mxu0 0.0
          %393 = vmatprep.subr.mxu0 0.0
          %394 = vmatpush1.msra.mxu0 0.0
          %395 = vmatprep.subr.mxu0 0.0
          %396 = vmatpush1.msra.mxu0 0.0
          %397 = vmatprep.subr.mxu0 0.0
          %398 = vmatpush1.msra.mxu0 0.0
          %399 = vmatprep.subr.mxu0 0.0
          %400 = vmatpush1.msra.mxu0 0.0
          %401 = vmatprep.subr.mxu0 0.0
          %402 = vmatpush1.msra.mxu0 0.0
          %403 = vmatprep.subr.mxu0 0.0
          %404 = vmatpush1.msra.mxu0 0.0
          %405 = vmatprep.subr.mxu0 0.0
          %406 = vmatpush1.msra.mxu0 0.0
          %407 = vmatprep.subr.mxu0 0.0
          %408 = vmatpush1.msra.mxu0 0.0
          %409 = vmatprep.subr.mxu0 0.0
          %410 = vmatpush1.msra.mxu0 0.0
          %411 = vmatprep.subr.mxu0 0.0
          %412 = vmatpush1.msra.mxu0 0.0
          %413 = vmatprep.subr.mxu0 0.0
          %414 = vmatpush1.msra.mxu0 0.0
          %415 = vmatprep.subr.mxu0 0.0
          %416 = vmatpush1.msra.mxu0 0.0
          %417 = vmatprep.subr.mxu0 0.0
          %418 = vmatpush1.msra.mxu0 0.0
          %419 = vmatprep.subr.mxu0 0.0
          %420 = vmatpush1.msra.mxu0 0.0
          %421 = vmatprep.subr.mxu0 0.0
          %422 = vmatpush1.msra.mxu0 0.0
          %423 = vmatprep.subr.mxu0 0.0
          %424 = vmatpush1.msra.mxu0 0.0
          %425 = vmatprep.mubr.f32.mxu0 0.0
          %426 = vmatmul.mubr.f32.gmra.mrb[0].mxu0 %v359
          %v427 = vpop.f32.mrb[0].mxu0
          %v428 = vadd.f32 %v356, %v427
          %v429 = vpop.f32.mrb[0].mxu0
          %430 = vdwg.mxu0
          %v431 = vadd.f32 %v428, %v344
          %v432 = vmax.f32 %v431, 0.0
          %v433 = vld [vmem:[%s3] sm:$0xff]
          %v434 = vld [vmem:[%s3 + $0x8] sm:$0xff]
          %v435 = vld [vmem:[%s3 + $0x10] sm:$0xff]
          %v436 = vld [vmem:[%s3 + $0x18] sm:$0xff]
          %v437 = vlaneseq
          %v438 = vshrl.u32 %v437, 7
          %v439 = vsub.s32 0, %v438
          %v440 = vrot.slane %v346, %v439
          %v442 = vsel %vm357, %v432, 0
          %444 = vmatprep.subr.mxu0 0.0
          %445 = vmatpush1.msra.mxu0 %v433
          %446 = vmatprep.subr.mxu0 0.0
          %447 = vmatpush1.msra.mxu0 %v434
          %448 = vmatprep.subr.mxu0 0.0
          %449 = vmatpush1.msra.mxu0 %v435
          %450 = vmatprep.subr.mxu0 0.0
          %451 = vmatpush1.msra.mxu0 %v436
          %452 = vmatprep.subr.mxu0 0.0
          %453 = vmatpush1.msra.mxu0 0.0
          %454 = vmatprep.subr.mxu0 0.0
          %455 = vmatpush1.msra.mxu0 0.0
          %456 = vmatprep.subr.mxu0 0.0
          %457 = vmatpush1.msra.mxu0 0.0
          %458 = vmatprep.subr.mxu0 0.0
          %459 = vmatpush1.msra.mxu0 0.0
          %460 = vmatprep.subr.mxu0 0.0
          %461 = vmatpush1.msra.mxu0 0.0
          %462 = vmatprep.subr.mxu0 0.0
          %463 = vmatpush1.msra.mxu0 0.0
          %464 = vmatprep.subr.mxu0 0.0
          %465 = vmatpush1.msra.mxu0 0.0
          %466 = vmatprep.subr.mxu0 0.0
          %467 = vmatpush1.msra.mxu0 0.0
          %468 = vmatprep.subr.mxu0 0.0
          %469 = vmatpush1.msra.mxu0 0.0
          %470 = vmatprep.subr.mxu0 0.0
          %471 = vmatpush1.msra.mxu0 0.0
          %472 = vmatprep.subr.mxu0 0.0
          %473 = vmatpush1.msra.mxu0 0.0
          %474 = vmatprep.subr.mxu0 0.0
          %475 = vmatpush1.msra.mxu0 0.0
          %476 = vmatprep.subr.mxu0 0.0
          %477 = vmatpush1.msra.mxu0 0.0
          %478 = vmatprep.subr.mxu0 0.0
          %479 = vmatpush1.msra.mxu0 0.0
          %480 = vmatprep.subr.mxu0 0.0
          %481 = vmatpush1.msra.mxu0 0.0
          %482 = vmatprep.subr.mxu0 0.0
          %483 = vmatpush1.msra.mxu0 0.0
          %484 = vmatprep.subr.mxu0 0.0
          %485 = vmatpush1.msra.mxu0 0.0
          %486 = vmatprep.subr.mxu0 0.0
          %487 = vmatpush1.msra.mxu0 0.0
          %488 = vmatprep.subr.mxu0 0.0
          %489 = vmatpush1.msra.mxu0 0.0
          %490 = vmatprep.subr.mxu0 0.0
          %491 = vmatpush1.msra.mxu0 0.0
          %492 = vmatprep.subr.mxu0 0.0
          %493 = vmatpush1.msra.mxu0 0.0
          %494 = vmatprep.subr.mxu0 0.0
          %495 = vmatpush1.msra.mxu0 0.0
          %496 = vmatprep.subr.mxu0 0.0
          %497 = vmatpush1.msra.mxu0 0.0
          %498 = vmatprep.subr.mxu0 0.0
          %499 = vmatpush1.msra.mxu0 0.0
          %500 = vmatprep.subr.mxu0 0.0
          %501 = vmatpush1.msra.mxu0 0.0
          %502 = vmatprep.subr.mxu0 0.0
          %503 = vmatpush1.msra.mxu0 0.0
          %504 = vmatprep.subr.mxu0 0.0
          %505 = vmatpush1.msra.mxu0 0.0
          %506 = vmatprep.subr.mxu0 0.0
          %507 = vmatpush1.msra.mxu0 0.0
          %508 = vmatprep.mubr.f32.mxu0 0.0
          %509 = vmatmul.mubr.f32.gmra.mrb[0].mxu0 %v442
          %v510 = vpop.f32.mrb[0].mxu0
          %v511 = vadd.f32 %v440, %v510
          %v512 = vpop.f32.mrb[0].mxu0
          %513 = vdwg.mxu0
          %v514 = vadd.f32 %v511, %v432
          %v515 = vmax.f32 %v514, 0.0
          %v516 = vlaneseq
          %v517 = vshrl.u32 %v516, 7
          %v518 = vsub.s32 0, %v517
          %v519 = vrot.slane %v347, %v518
          %v520 = vmul.f32 %v515, %v519
          %vm521 = vcmask 254976
          %v522 = vsel %vm521, %v520, 0.0
          %523 = vadd.xlane.f32.xlu0 %v522
          %v524 = vpop.xlane.xlu0 %523
          %v525 = vlaneseq
          %v526 = vshrl.u32 %v525, 7
          %v527 = vsub.s32 0, %v526
          %v528 = vrot.slane %v348, %v527
          %v529 = vadd.f32 %v524, %v528
          %531 = vset.pattern.permute.xlu0 0
          %532 = vperm.xlu0 %531, %v529
          %v533 = vpop.permute.xlu0 %532
          %vm535 = vcmask 1041408
          %v536 = vsel %vm535, %v533, 0.0
          %537 = vst [vmem:[%s260] sm:$0xff] %v536
        $region52: #{tpu_custom_call.1} parent=39 // pred_fallthru
          _
        %s538 = sand.u32 %s158, 1
        %s539 = scalar_lea.sflag [#allocation5], %s538
        %s540 = sand.u32 %s158, 1
        %s541 = smul.addr %s540, 8
        %s542 = scalar_lea.vmem [#allocation4], %s541
        // Predicated region
        $region53: #{tpu_custom_call.1} parent=39 // pred_check
          %p543 = pneg %p168
        $region54: #{tpu_custom_call.1} parent=39 // pred_check_branch
          %545 = sbr.rel (%p543) target = $region56
        $region55: #{tpu_custom_call.1} parent=39 // pred_region
          %s547 = ssub.s32 128, 128
          %548 = vsyncadd %s539, %s547
          %s549 = smul.addr %s23, 128
          %s550 = scalar_lea.hbm %s5, %s549
          %s552 = sshll.u32 %s542, 4
          %s553 = int_to_ptr.vmem [resolvable:$true] %s552
          %555 = dma.vmem_to_hbm [thread:$0]  %s553, 128, %s550, %s539
        $region56: #{tpu_custom_call.1} parent=39 // pred_fallthru
          _
      $region40: #{tpu_custom_call.1} parent=5 // pred_fallthru
        _
      %p556 = scmp.le.s32.totalorder 2, %s14
      // Predicated region
      $region57: #{tpu_custom_call.1} parent=5 // pred_check
        %p557 = pneg %p556
      $region58: #{tpu_custom_call.1} parent=5 // pred_check_branch
        %559 = sbr.rel (%p557) target = $region60
      $region59: #{tpu_custom_call.1} parent=5 // pred_region
        %s560 = ssub.s32 %s14, 2
        // Predicated region
        $region61: #{tpu_custom_call.1} parent=59 // pred_check
          %p561 = pneg %p174
        $region62: #{tpu_custom_call.1} parent=59 // pred_check_branch
          %563 = sbr.rel (%p561) target = $region64
        $region63: #{tpu_custom_call.1} parent=59 // pred_region
          %s564 = sand.u32 %s159, 1
          %s565 = scalar_lea.sflag [#allocation5], %s564
          %s566 = sand.u32 %s159, 1
          %s567 = smul.addr %s566, 8
          %s568 = scalar_lea.vmem [#allocation4], %s567
          %569 = dma.done %s565, 128
        $region64: #{tpu_custom_call.1} parent=59 // pred_fallthru
          _
      $region60: #{tpu_custom_call.1} parent=5 // pred_fallthru
        _
    $region6: #{tpu_custom_call.1} parent=1 // loop_footer
      %s18 = sadd.s32 1, %s14
    $region7: #{tpu_custom_call.1} parent=1 // loop_footer_branch
      %13 = sbr.rel target = $region3
    $region8: #{tpu_custom_call.1} parent=1 // loop_exit
      _
    %570 = vsyncpa [#allocation5], 1
    %s571 = scalar_lea.sflag [#allocation5], 1
    %572 = vsyncpa %s571, 1

</llo_original>
